<compile_context>
chip_gen: v6e
topology: v6e:2x2x1
jax: 0.10.0
libtpu: 0.0.40
codegen_flags: <defaults>
</compile_context>

<pallas_src>
import jax
import jax.numpy as jnp
from jax import lax
from jax.experimental import pallas as pl
from jax.experimental.pallas import tpu as pltpu


def _make_kernel(mask_diag: bool, compute_dtype):
    """mask_diag: True iff margin > 0 (otherwise the diagonal can never win a
    0-clamped max and no mask is required)."""

    def kernel(dcol_ref, drow_ref, s_ref, rowpart_ref, colmax_ref):
        j = pl.program_id(0)          # column tile (outer, parallel)
        i = pl.program_id(1)          # row tile (inner, arbitrary)
        tm, tn = s_ref.shape

        s = s_ref[...]
        if s.dtype != compute_dtype:
            s = s.astype(compute_dtype)

        d1 = dcol_ref[...]            # (TM, 1)  diag[i*TM:(i+1)*TM] - margin
        d2 = drow_ref[...]            # (1, TN)  diag[j*TN:(j+1)*TN] - margin

        raw_s = s - d1                # caption-retrieval hinge, pre-clamp
        raw_im = s - d2               # image-retrieval hinge, pre-clamp

        if mask_diag:
            # margin > 0: the diagonal entry equals margin and could pollute the
            # max, so push it to -inf; clamping happens after the reduction.
            row_ids = lax.broadcasted_iota(jnp.int32, (tm, 1), 0) + i * tm
            col_ids = lax.broadcasted_iota(jnp.int32, (1, tn), 1) + j * tn
            on_diag = row_ids == col_ids                      # (TM, TN) via broadcast
            neg_inf = jnp.asarray(float("-inf"), dtype=compute_dtype)
            raw_s = jnp.where(on_diag, neg_inf, raw_s)
            raw_im = jnp.where(on_diag, neg_inf, raw_im)

        # Caption retrieval: partial row max over this column tile (lane reduce).
        # Clamp(min=0) is applied in the wrapper after combining column tiles.
        row_max = jnp.max(raw_s, axis=1, keepdims=True).astype(jnp.float32)
        rowpart_ref[...] = row_max.reshape(1, tm, 1)

        # Image retrieval: running column max across row tiles; the 0-init of
        # the resident output block folds in clamp(min=0).
        tile_colmax = jnp.max(raw_im, axis=0, keepdims=True).astype(jnp.float32)

        @pl.when(i == 0)
        def _init():
            colmax_ref[...] = jnp.zeros_like(colmax_ref)

        colmax_ref[...] = jnp.maximum(colmax_ref[...], tile_colmax)

    return kernel


def _pick_tiles(n: int, itemsize: int) -> tuple[int, int]:
    """Pick (row_tile, col_tile) so blocks satisfy the (8, 128) rule and the
    per-step working set (2 double-buffered input tiles + ~3 f32 temporaries)
    stays under ~12 MiB (below the smallest default scoped-VMEM limit)."""
    # Column (lane) tile: multiple of 128 dividing N, capped at 1024; else full.
    if n % 128 == 0:
        tn = min(n, 1024)
        while n % tn != 0:
            tn -= 128
    else:
        tn = n
    # Row (sublane) tile: multiple of 8 dividing N, sized to the VMEM budget.
    if n % 8 == 0:
        budget = 12 * 1024 * 1024
        per_row = tn * (2 * itemsize + 3 * 4)
        tm = max(8, min(512, budget // per_row, n))
        tm -= tm % 8
        tm = max(tm, 8)
        while n % tm != 0:
            tm -= 8
    else:
        # TODO(synk): pad N up to a multiple of 8 instead of a full-height block
        # when N is large and not 8-aligned.
        tm = n
    return tm, tn


def contrastive_loss(scores: jax.Array, margin: float = 0.0, *,
                     row_tile: int | None = None,
                     col_tile: int | None = None) -> jax.Array:
    """Pallas implementation of ContrastiveLoss.forward(scores)."""
    assert scores.ndim == 2 and scores.shape[0] == scores.shape[1]
    n = scores.shape[0]
    margin = float(margin)

    if scores.dtype == jnp.dtype(jnp.bfloat16):
        compute_dtype = jnp.bfloat16
    else:
        compute_dtype = jnp.float32

    itemsize = jnp.dtype(scores.dtype).itemsize
    tm, tn = _pick_tiles(n, itemsize)
    if row_tile is not None:
        tm = int(row_tile)
    if col_tile is not None:
        tn = int(col_tile)
    assert n % tm == 0 and n % tn == 0, (n, tm, tn)
    gi, gj = n // tm, n // tn

    # Fold the margin into the diagonal once: raw = scores - (diag - margin).
    diag_shift = (jnp.diag(scores).astype(jnp.float32) - margin).astype(compute_dtype)
    diag_col = diag_shift.reshape(n, 1)
    diag_row = diag_shift.reshape(1, n)

    tile_bytes = tm * tn * (2 * itemsize + 3 * 4)
    vmem_limit = int(min(64 * 1024 * 1024, max(20 * 1024 * 1024, 2 * tile_bytes)))
    cost = pl.CostEstimate(
        flops=int(6 * n * n),
        transcendentals=0,
        bytes_accessed=int(n * n * itemsize + (gj * n + 3 * n) * 4),
    )

    row_partials, col_max = pl.pallas_call(
        _make_kernel(margin > 0.0, compute_dtype),
        out_shape=(
            jax.ShapeDtypeStruct((gj, n, 1), jnp.float32),   # per-column-tile row maxes
            jax.ShapeDtypeStruct((1, n), jnp.float32),       # clamped column maxes
        ),
        grid_spec=pltpu.PrefetchScalarGridSpec(
            num_scalar_prefetch=0,
            grid=(gj, gi),                                   # columns outer, rows inner
            in_specs=[
                pl.BlockSpec((tm, 1), lambda j, i: (i, 0)),   # (diag - margin) rows
                pl.BlockSpec((1, tn), lambda j, i: (0, j)),   # (diag - margin) cols
                pl.BlockSpec((tm, tn), lambda j, i: (i, j)),  # scores tile, native dtype
            ],
            out_specs=[
                pl.BlockSpec((1, tm, 1), lambda j, i: (j, i, 0)),
                pl.BlockSpec((1, tn), lambda j, i: (0, j)),
            ],
        ),
        compiler_params=pltpu.CompilerParams(
            dimension_semantics=("parallel", "arbitrary"),
            vmem_limit_bytes=vmem_limit,
        ),
        cost_estimate=cost,
    )(diag_col, diag_row, scores)

    row_max = jnp.max(row_partials[:, :, 0], axis=0)          # combine column tiles
    return jnp.sum(jnp.maximum(row_max, 0.0)) + jnp.sum(col_max)


def _reference(scores: jax.Array, margin: float = 0.0) -> jax.Array:
    """Pure-JAX reference mirroring the PyTorch module."""
    scores = scores.astype(jnp.float32)
    diag = jnp.diag(scores).reshape(-1, 1)
    cost_s = jnp.maximum(margin + scores - diag, 0.0)
    cost_im = jnp.maximum(margin + scores - diag.T, 0.0)
    eye = jnp.eye(scores.shape[0], dtype=bool)
    cost_s = jnp.where(eye, 0.0, cost_s)
    cost_im = jnp.where(eye, 0.0, cost_im)
    return jnp.sum(jnp.max(cost_s, axis=1)) + jnp.sum(jnp.max(cost_im, axis=0))


if __name__ == "__main__":
    key = jax.random.PRNGKey(0)

    # Case 1: tiny batch, single tile, margin > 0 exercises the diagonal mask.
    n1, m1 = 8, 0.2
    scores1 = jax.random.normal(key, (n1, n1), dtype=jnp.float32)
    loss1 = contrastive_loss(scores1, margin=m1)
    jax.block_until_ready(loss1)
    ref1 = _reference(scores1, margin=m1)
    assert jnp.allclose(loss1, ref1, rtol=1e-5, atol=1e-4), (loss1, ref1)

    # Case 2: multi-tile 2-D grid (2 column tiles x 4 row tiles), default
    # margin = 0 exercises the mask-free fast path and the running accumulators.
    n2 = 256
    scores2 = jax.random.normal(jax.random.PRNGKey(1), (n2, n2), dtype=jnp.float32)
    loss2 = contrastive_loss(scores2, margin=0.0, row_tile=64, col_tile=128)
    jax.block_until_ready(loss2)
    ref2 = _reference(scores2, margin=0.0)
    assert jnp.allclose(loss2, ref2, rtol=1e-5, atol=1e-3), (loss2, ref2)

    # Case 3: same multi-tile grid with margin > 0 (diag -> -inf, clamp after
    # the reductions) to check cross-tile combination of the masked hinges.
    loss3 = contrastive_loss(scores2, margin=0.1, row_tile=64, col_tile=128)
    jax.block_until_ready(loss3)
    ref3 = _reference(scores2, margin=0.1)
    assert jnp.allclose(loss3, ref3, rtol=1e-5, atol=1e-3), (loss3, ref3)

    print("KERNEL_OK")
</pallas_src>

<mosaic_0001>
module attributes {stable_mosaic.version = 11 : i64} {
  func.func @kernel(%arg0: i32, %arg1: i32, %arg2: memref<8x1xf32, #tpu.memory_space<vmem>>, %arg3: memref<1x8xf32, #tpu.memory_space<vmem>>, %arg4: memref<8x8xf32, #tpu.memory_space<vmem>>, %arg5: memref<1x8x1xf32, #tpu.memory_space<vmem>>, %arg6: memref<1x8xf32, #tpu.memory_space<vmem>>) attributes {dimension_semantics = [#tpu.dimension_semantics<parallel>, #tpu.dimension_semantics<arbitrary>], iteration_bounds = array<i64: 1, 1>, scalar_prefetch = 0 : i64, scratch_operands = 0 : i64, tpu.core_type = #tpu.core_type<tc>, window_params = [{transform_indices = @transform_0, window_bounds = array<i64: 8, 1>}, {transform_indices = @transform_1, window_bounds = array<i64: 1, 8>}, {transform_indices = @transform_2, window_bounds = array<i64: 8, 8>}, {transform_indices = @transform_3, window_bounds = array<i64: 1, 8, 1>}, {transform_indices = @transform_4, window_bounds = array<i64: 1, 8>}]} {
    %c0 = arith.constant 0 : index
    %c0_0 = arith.constant 0 : index
    %0 = vector.load %arg4[%c0, %c0_0] : memref<8x8xf32, #tpu.memory_space<vmem>>, vector<8x8xf32>
    %c0_1 = arith.constant 0 : index
    %c0_2 = arith.constant 0 : index
    %1 = vector.load %arg2[%c0_1, %c0_2] : memref<8x1xf32, #tpu.memory_space<vmem>>, vector<8x1xf32>
    %c0_3 = arith.constant 0 : index
    %c0_4 = arith.constant 0 : index
    %2 = vector.load %arg3[%c0_3, %c0_4] : memref<1x8xf32, #tpu.memory_space<vmem>>, vector<1x8xf32>
    %3 = vector.broadcast %1 : vector<8x1xf32> to vector<8x8xf32>
    %4 = arith.subf %0, %3 : vector<8x8xf32>
    %5 = vector.broadcast %2 : vector<1x8xf32> to vector<8x8xf32>
    %6 = arith.subf %0, %5 : vector<8x8xf32>
    %7 = tpu.iota {dimensions = array<i32: 0>} : vector<8x1xi32>
    %c8_i32 = arith.constant 8 : i32
    %8 = arith.muli %arg1, %c8_i32 : i32
    %9 = vector.broadcast %8 : i32 to vector<8x1xi32>
    %10 = arith.addi %7, %9 : vector<8x1xi32>
    %11 = tpu.iota {dimensions = array<i32: 1>} : vector<1x8xi32>
    %c8_i32_5 = arith.constant 8 : i32
    %12 = arith.muli %arg0, %c8_i32_5 : i32
    %13 = vector.broadcast %12 : i32 to vector<1x8xi32>
    %14 = arith.addi %11, %13 : vector<1x8xi32>
    %15 = vector.broadcast %10 : vector<8x1xi32> to vector<8x8xi32>
    %16 = vector.broadcast %14 : vector<1x8xi32> to vector<8x8xi32>
    %17 = arith.cmpi eq, %15, %16 : vector<8x8xi32>
    %cst = arith.constant 0xFF800000 : f32
    %18 = vector.broadcast %cst : f32 to vector<8x8xf32>
    %19 = arith.select %17, %18, %4 : vector<8x8xi1>, vector<8x8xf32>
    %cst_6 = arith.constant 0xFF800000 : f32
    %20 = vector.broadcast %cst_6 : f32 to vector<8x8xf32>
    %21 = arith.select %17, %20, %6 : vector<8x8xi1>, vector<8x8xf32>
    %cst_7 = arith.constant dense<0xFF800000> : vector<8xf32>
    %22 = vector.multi_reduction <maximumf>, %19, %cst_7 [1] : vector<8x8xf32> to vector<8xf32>
    %23 = vector.shape_cast %22 : vector<8xf32> to vector<8x1xf32>
    %24 = vector.shape_cast %23 : vector<8x1xf32> to vector<1x8x1xf32>
    %c0_8 = arith.constant 0 : index
    %c0_9 = arith.constant 0 : index
    %c0_10 = arith.constant 0 : index
    %25 = vector.load %arg5[%c0_8, %c0_9, %c0_10] : memref<1x8x1xf32, #tpu.memory_space<vmem>>, vector<1x8x1xf32>
    tpu.vector_store %arg5[%c0_8, %c0_9, %c0_10], %24 {strides = array<i32>} : memref<1x8x1xf32, #tpu.memory_space<vmem>>, vector<1x8x1xf32>,
    %cst_11 = arith.constant dense<0xFF800000> : vector<8xf32>
    %26 = vector.multi_reduction <maximumf>, %21, %cst_11 [0] : vector<8x8xf32> to vector<8xf32>
    %27 = vector.shape_cast %26 : vector<8xf32> to vector<1x8xf32>
    %c0_i32 = arith.constant 0 : i32
    %28 = arith.cmpi eq, %arg1, %c0_i32 : i32
    %29 = arith.extui %28 : i1 to i32
    %c0_i32_12 = arith.constant 0 : i32
    %30 = arith.cmpi ne, %29, %c0_i32_12 : i32
    scf.if %30 {
      %cst_17 = arith.constant 0.000000e+00 : f32
      %34 = vector.broadcast %cst_17 : f32 to vector<1x8xf32>
      %c0_18 = arith.constant 0 : index
      %c0_19 = arith.constant 0 : index
      %35 = vector.load %arg6[%c0_18, %c0_19] : memref<1x8xf32, #tpu.memory_space<vmem>>, vector<1x8xf32>
      tpu.vector_store %arg6[%c0_18, %c0_19], %34 {strides = array<i32>} : memref<1x8xf32, #tpu.memory_space<vmem>>, vector<1x8xf32>,
    } else {
    }
    %c0_13 = arith.constant 0 : index
    %c0_14 = arith.constant 0 : index
    %31 = vector.load %arg6[%c0_13, %c0_14] : memref<1x8xf32, #tpu.memory_space<vmem>>, vector<1x8xf32>
    %32 = arith.maximumf %31, %27 : vector<1x8xf32>
    %c0_15 = arith.constant 0 : index
    %c0_16 = arith.constant 0 : index
    %33 = vector.load %arg6[%c0_15, %c0_16] : memref<1x8xf32, #tpu.memory_space<vmem>>, vector<1x8xf32>
    tpu.vector_store %arg6[%c0_15, %c0_16], %32 {strides = array<i32>} : memref<1x8xf32, #tpu.memory_space<vmem>>, vector<1x8xf32>,
    return
  }
  func.func @transform_0(%arg0: i32, %arg1: i32) -> (i32, i32) {
    %c0_i32 = arith.constant 0 : i32
    %c0_i32_0 = arith.constant 0 : i32
    return %arg1, %c0_i32 : i32, i32
  }
  func.func @transform_1(%arg0: i32, %arg1: i32) -> (i32, i32) {
    %c0_i32 = arith.constant 0 : i32
    %c0_i32_0 = arith.constant 0 : i32
    return %c0_i32, %arg0 : i32, i32
  }
  func.func @transform_2(%arg0: i32, %arg1: i32) -> (i32, i32) {
    %c0_i32 = arith.constant 0 : i32
    return %arg1, %arg0 : i32, i32
  }
  func.func @transform_3(%arg0: i32, %arg1: i32) -> (i32, i32, i32) {
    %c0_i32 = arith.constant 0 : i32
    %c0_i32_0 = arith.constant 0 : i32
    return %arg0, %arg1, %c0_i32 : i32, i32, i32
  }
  func.func @transform_4(%arg0: i32, %arg1: i32) -> (i32, i32) {
    %c0_i32 = arith.constant 0 : i32
    %c0_i32_0 = arith.constant 0 : i32
    return %c0_i32, %arg0 : i32, i32
  }
}

</mosaic_0001>

<llo_original>
// kernel: tpu_custom_call.1
$region0: #{tpu_custom_call.1}
  #allocation0 [shape = 'u32[]', space=smem, size = 0x4, offset = 0x4, fixed_abs, tag = 'smem constant byte address 0x4 - core index']
  #allocation1 [shape = 'u32[144,128]{1,0:T(1,128)}', space=vmem, size = 0x12000, scoped, tag = 'internal scratch']
  %s0 = inlined_call_operand.vmem [shape: f32[8,1], index: 0, kind: input, shape index: {}]
  %s1 = inlined_call_operand.vmem [shape: f32[1,8], index: 1, kind: input, shape index: {}]
  %s2 = inlined_call_operand.vmem [shape: f32[8,8], index: 2, kind: input, shape index: {}]
  %s3 = inlined_call_operand.vmem [shape: f32[1,8,1], index: 3, kind: output, shape index: {0}]
  %s4 = inlined_call_operand.hbm [shape: f32[1,8], index: 4, kind: output, shape index: {1}]
  %5 = xla_tuple %s3, %s4
  %s6 = sld [smem:[#allocation0]]
  $region34: #{tpu_custom_call.1} parent=0
    _
  %s8 = ssub.s32 1, %s6
  %s9 = scalar_select 0, %s8, %s6
  $region1: #{tpu_custom_call.1} parent=0
    #allocation2 [shape = 'u8[512]{0}', space=vmem, size = 0x400, scoped, tag = 'output window, operand 1, single buffered']
    #allocation3 [shape = 's32[1]{0}', space=sflag, size = 0x4, scoped, tag = 'scoped memory for tpu_custom_call.1']
    %10 = vsyncpa [#allocation3], 0
    // Predicated region
    $region2: #{tpu_custom_call.1} parent=1 // pred_check
      _
    $region3: #{tpu_custom_call.1} parent=1 // pred_check_branch
      %12 = sbr.rel (0) target = $region5
    $region4: #{tpu_custom_call.1} parent=1 // pred_region
      _
    $region5: #{tpu_custom_call.1} parent=1 // pred_fallthru
      _
    // Predicated region
    $region6: #{tpu_custom_call.1} parent=1 // pred_check
      _
    $region7: #{tpu_custom_call.1} parent=1 // pred_check_branch
      %14 = sbr.rel (0) target = $region9
    $region8: #{tpu_custom_call.1} parent=1 // pred_region
      _
    $region9: #{tpu_custom_call.1} parent=1 // pred_fallthru
      _
    // Predicated region
    $region10: #{tpu_custom_call.1} parent=1 // pred_check
      _
    $region11: #{tpu_custom_call.1} parent=1 // pred_check_branch
      %16 = sbr.rel (0) target = $region13
    $region12: #{tpu_custom_call.1} parent=1 // pred_region
      _
    $region13: #{tpu_custom_call.1} parent=1 // pred_fallthru
      _
    %v17 = vld [vmem:[%s2] sm:$0xff]
    %v18 = vld [vmem:[%s0] sm:$0xff]
    %v19 = vld [vmem:[%s1] sm:$0x1]
    %21 = vset.pattern.permute.xlu0 0
    %22 = vperm.xlu0 %21, %v18
    %v23 = vpop.permute.xlu0 %22
    %v25 = vsub.f32 %v17, %v23
    %v27 = vlaneseq
    %v28 = vshrl.u32 %v27, 7
    %v29 = vsub.s32 0, %v28
    %v30 = vrot.slane %v19, %v29
    %v32 = vsub.f32 %v17, %v30
    %v33 = vlaneseq
    %v34 = vshrl.u32 %v33, 7
    %s35 = smul.u32 0, 8
    %v36 = vstv %s35
    %v37 = vadd.s32 %v34, %v36
    %v38 = vlaneseq
    %v39 = vand.u32 %v38, 127
    %s40 = smul.u32 0, 8
    %v41 = vstv %s40
    %v42 = vadd.s32 %v39, %v41
    %vm43 = vcmp.eq.s32.totalorder %v37, %v42
    %v44 = vsel %vm43, -inf, %v25
    %v45 = vsel %vm43, -inf, %v32
    %vm46 = vcmask 64512
    %v47 = vsel %vm46, %v44, -inf
    %48 = vmax.xlane.f32.xlu0 %v47
    %v49 = vpop.xlane.xlu0 %48
    %vm50 = vcmask 7168
    %51 = vst.msk [vmem:[%s3] sm:$0xff] %vm50, %v49
    %v52 = vsel %vm46, %v45, -inf
    %v53 = vrot.slane %v52, 4
    %v54 = vmax.f32 %v52, %v53
    %v55 = vrot.slane %v54, 2
    %v56 = vmax.f32 %v54, %v55
    %v57 = vrot.slane %v56, 1
    %v58 = vmax.f32 %v56, %v57
    %p59 = scmp.eq.s32.totalorder 0, 0
    // Predicated region
    $region14: #{tpu_custom_call.1} parent=1 // pred_check
      %p60 = pneg %p59
    $region15: #{tpu_custom_call.1} parent=1 // pred_check_branch
      %62 = sbr.rel (%p60) target = $region17
    $region16: #{tpu_custom_call.1} parent=1 // pred_region
      %vm63 = vcmask 57344
      %64 = vst.msk [vmem:[#allocation2] sm:$0x1] %vm63, 0.0
    $region17: #{tpu_custom_call.1} parent=1 // pred_fallthru
      _
    %v65 = vld [vmem:[#allocation2] sm:$0x1]
    %v66 = vmax.f32 %v65, %v58
    %vm67 = vcmask 57344
    %68 = vst.msk [vmem:[#allocation2] sm:$0x1] %vm67, %v66
    // Predicated region
    $region18: #{tpu_custom_call.1} parent=1 // pred_check
      _
    $region19: #{tpu_custom_call.1} parent=1 // pred_check_branch
      %70 = sbr.rel (0) target = $region21
    $region20: #{tpu_custom_call.1} parent=1 // pred_region
      _
    $region21: #{tpu_custom_call.1} parent=1 // pred_fallthru
      _
    // Predicated region
    $region22: #{tpu_custom_call.1} parent=1 // pred_check
      _
    $region23: #{tpu_custom_call.1} parent=1 // pred_check_branch
      %72 = sbr.rel (0) target = $region25
    $region24: #{tpu_custom_call.1} parent=1 // pred_region
      %s74 = ssub.s32 16, 16
      %75 = vsyncadd [#allocation3], %s74
      %s77 = sshll.u32 [#allocation2], 4
      %s78 = int_to_ptr.vmem [resolvable:$true] %s77
      %80 = dma.vmem_to_hbm [thread:$0]  %s78, 16, %s4, [#allocation3]
    $region25: #{tpu_custom_call.1} parent=1 // pred_fallthru
      _
    // Predicated region
    $region26: #{tpu_custom_call.1} parent=1 // pred_check
      _
    $region27: #{tpu_custom_call.1} parent=1 // pred_check_branch
      %82 = sbr.rel (0) target = $region29
    $region28: #{tpu_custom_call.1} parent=1 // pred_region
      _
    $region29: #{tpu_custom_call.1} parent=1 // pred_fallthru
      _
    // Predicated region
    $region30: #{tpu_custom_call.1} parent=1 // pred_check
      _
    $region31: #{tpu_custom_call.1} parent=1 // pred_check_branch
      %84 = sbr.rel (0) target = $region33
    $region32: #{tpu_custom_call.1} parent=1 // pred_region
      %85 = dma.done [#allocation3], 16
    $region33: #{tpu_custom_call.1} parent=1 // pred_fallthru
      _
    %86 = vsyncpa [#allocation3], 1

</llo_original>
